<compile_context>
chip_gen: v6e
topology: v6e:2x2x1
jax: 0.10.0
libtpu: 0.0.40
codegen_flags: <defaults>
</compile_context>

<pallas_src>
import functools

import jax
import jax.numpy as jnp
from jax.experimental import pallas as pl
from jax.experimental.pallas import tpu as pltpu


# --------------------------------------------------------------------------
# Pallas kernel: one FTA module on one (split, batch-tile) block.
# --------------------------------------------------------------------------
def fta_kernel(x_ref, w_ref, b_ref, o_ref):
    # x_ref : (tb, t, c, hw)   f32, spatial plane (h*w) on the lane axis
    # w_ref : (c, 2c)          fused Conv1d weights, transposed (in, out)
    # b_ref : (1, 2c)          fused Conv1d biases
    # o_ref : (tb, t_out, c, hw)
    tb, t, c, hw = x_ref.shape
    t_out = o_ref.shape[1]

    o1s, o2s = [], []
    for tt in range(t_out):
        i0 = 3 * tt
        # FP_3: MaxPool3d((3,1,1), stride (3,1,1), pad 0) over time:
        # element-wise max of three aligned (c, hw) vreg planes.
        o1 = jnp.maximum(jnp.maximum(x_ref[:, i0], x_ref[:, i0 + 1]),
                         x_ref[:, i0 + 2])
        # FP_5: MaxPool3d((5,1,1), stride (3,1,1), pad (1,0,0)). The 5-frame
        # window contains the 3-frame window, so reuse o1 and only max in the
        # two boundary frames (clipped window == -inf padding for max-pool).
        o2 = o1
        if i0 - 1 >= 0:
            o2 = jnp.maximum(o2, x_ref[:, i0 - 1])
        if i0 + 3 < t:
            o2 = jnp.maximum(o2, x_ref[:, i0 + 3])
        o1s.append(o1)
        o2s.append(o2)

    O1 = jnp.stack(o1s, axis=1)          # (tb, t_out, c, hw)
    O2 = jnp.stack(o2s, axis=1)

    # gap(FP_3 + FP_5): mean over the spatial plane (lane reduction).
    hat = jnp.mean(O1 + O2, axis=-1)     # (tb, t_out, c)
    hat2 = hat.reshape(tb * t_out, c)

    # Both 1x1 Conv1d's as one MXU matmul: (tb*t_out, c) @ (c, 2c) + bias.
    logits = jnp.dot(hat2, w_ref[...],
                     preferred_element_type=jnp.float32) + b_ref[...]
    l1 = logits[:, :c]
    l2 = logits[:, c:]

    # Softmax over the two aggregation branches.
    mmax = jnp.maximum(l1, l2)
    e1 = jnp.exp(l1 - mmax)
    e2 = jnp.exp(l2 - mmax)
    inv = pl.reciprocal(e1 + e2, approx=False)   # exact; operands are tiny
    s1 = (e1 * inv).reshape(tb, t_out, c)[..., None]
    s2 = (e2 * inv).reshape(tb, t_out, c)[..., None]

    # Weighted fusion of the two pooled feature maps; one block store.
    o_ref[...] = s1 * O1 + s2 * O2


# --------------------------------------------------------------------------
# Wrappers
# --------------------------------------------------------------------------
def _pick_batch_tile(bs, bytes_per_batch, budget=2 * 1024 * 1024):
    """Largest divisor of bs whose (in+out) block stays under `budget` bytes."""
    best = 1
    for d in range(1, bs + 1):
        if bs % d == 0 and d * bytes_per_batch <= budget:
            best = d
    return best


def _stack_params(params):
    # Fuse both branch convs per split: W -> (m, c, 2c) (in, out), b -> (m, 1, 2c)
    w_cat = jnp.stack(
        [jnp.concatenate([w1.T, w2.T], axis=1) for (w1, _, w2, _) in params],
        axis=0)
    b_cat = jnp.stack(
        [jnp.concatenate([b1, b2], axis=0)[None, :] for (_, b1, _, b2) in params],
        axis=0)
    return w_cat, b_cat


def _fta_pallas(xs, w_cat, b_cat, t_out):
    m, bs, t, c, hw = xs.shape
    bytes_per_batch = (t + t_out) * c * hw * 4
    tb = _pick_batch_tile(bs, bytes_per_batch)
    grid = (m, bs // tb)

    return pl.pallas_call(
        fta_kernel,
        out_shape=jax.ShapeDtypeStruct((m, bs, t_out, c, hw), jnp.float32),
        grid=grid,
        in_specs=[
            pl.BlockSpec((None, tb, t, c, hw), lambda i, b: (i, b, 0, 0, 0)),
            pl.BlockSpec((None, c, 2 * c), lambda i, b: (i, 0, 0)),
            pl.BlockSpec((None, 1, 2 * c), lambda i, b: (i, 0, 0)),
        ],
        out_specs=pl.BlockSpec((None, tb, t_out, c, hw),
                               lambda i, b: (i, b, 0, 0, 0)),
        compiler_params=pltpu.CompilerParams(
            dimension_semantics=("parallel", "parallel"),
            vmem_limit_bytes=32 * 1024 * 1024,
        ),
    )(xs, w_cat, b_cat)


def _fta_group_forward(x, params, hs):
    """All splits share the same height hs: one fused pallas_call."""
    bs, c, t, H, W = x.shape
    m = H // hs
    hw = hs * W
    t_out = (t - 3) // 3 + 1

    # (bs, c, t, H, W) -> (m, bs, t, c, hs*W): splits on the leading (grid)
    # axis, t off the vreg tile, spatial plane folded onto the lane axis.
    xs = x.reshape(bs, c, t, m, hs, W)
    xs = jnp.transpose(xs, (3, 0, 2, 1, 4, 5)).reshape(m, bs, t, c, hw)

    w_cat, b_cat = _stack_params(params)
    out = _fta_pallas(xs, w_cat, b_cat, t_out)

    out = out.reshape(m, bs, t_out, c, hs, W)
    out = jnp.transpose(out, (1, 3, 2, 0, 4, 5)).reshape(bs, c, t_out, m * hs, W)
    return out


def fta_block_forward(x, params, split_param):
    """FTA_Block: split x along H, apply FTA_i to split i, concat along H.

    x: (bs, c, t, H, W) float32; params: list of (W1, b1, W2, b2)."""
    if len(set(split_param)) == 1:
        return _fta_group_forward(x, params, split_param[0])
    # Non-uniform splits: per-split call of the same fused kernel (m = 1).
    pieces, start = [], 0
    for i, hsz in enumerate(split_param):
        xp = x[:, :, :, start:start + hsz, :]
        start += hsz
        pieces.append(_fta_group_forward(xp, [params[i]], hsz))
    return jnp.concatenate(pieces, axis=3)


# --------------------------------------------------------------------------
# Pure-JAX reference (mirrors PyTorch semantics) for a correctness check.
# --------------------------------------------------------------------------
def ref_fta(x5, w1, b1, w2, b2):
    bs, c, t, h, w = x5.shape
    t_out = (t - 3) // 3 + 1
    o1 = jnp.stack([jnp.max(x5[:, :, 3 * i:3 * i + 3], axis=2)
                    for i in range(t_out)], axis=2)
    o2 = jnp.stack([jnp.max(x5[:, :, max(3 * i - 1, 0):min(3 * i + 4, t)], axis=2)
                    for i in range(t_out)], axis=2)
    hat = jnp.mean(o1 + o2, axis=(3, 4))                       # (bs, c, t_out)
    l1 = jnp.einsum('oc,bct->bot', w1, hat) + b1[None, :, None]
    l2 = jnp.einsum('oc,bct->bot', w2, hat) + b2[None, :, None]
    s = jax.nn.softmax(jnp.stack([l1, l2], 0), axis=0)
    return s[0][..., None, None] * o1 + s[1][..., None, None] * o2


def ref_fta_block(x, params, split_param):
    pieces, start = [], 0
    for i, hsz in enumerate(split_param):
        xp = x[:, :, :, start:start + hsz, :]
        start += hsz
        pieces.append(ref_fta(xp, *params[i]))
    return jnp.concatenate(pieces, axis=3)


# --------------------------------------------------------------------------
if __name__ == "__main__":
    key = jax.random.PRNGKey(0)

    # Small shapes consistent with the module:
    # x: (bs, in_channels, t, H, W); split_param splits H; m = len(split_param)
    bs, c, t, H, W = 2, 8, 9, 16, 8
    split_param = [8, 8]
    m = len(split_param)

    key, kx = jax.random.split(key)
    x = jax.random.normal(kx, (bs, c, t, H, W), dtype=jnp.float32)

    # Deterministic parameters: for each FTA, two Conv1d(c, c, 1) layers.
    params = []
    for _ in range(m):
        key, k1, k2, k3, k4 = jax.random.split(key, 5)
        w1 = 0.1 * jax.random.normal(k1, (c, c), dtype=jnp.float32)   # (out, in)
        b1 = 0.1 * jax.random.normal(k2, (c,), dtype=jnp.float32)
        w2 = 0.1 * jax.random.normal(k3, (c, c), dtype=jnp.float32)
        b2 = 0.1 * jax.random.normal(k4, (c,), dtype=jnp.float32)
        params.append((w1, b1, w2, b2))

    run = functools.partial(fta_block_forward, params=params,
                            split_param=split_param)
    out = jax.block_until_ready(run(x))

    # Sanity check against the plain-JAX reference.
    ref = jax.block_until_ready(ref_fta_block(x, params, split_param))
    t_out = (t - 3) // 3 + 1
    assert out.shape == (bs, c, t_out, H, W), out.shape
    assert jnp.allclose(out, ref, atol=1e-5, rtol=1e-5), "mismatch vs reference"

    print("KERNEL_OK")
</pallas_src>

<mosaic_0001>
module attributes {stable_mosaic.version = 11 : i64} {
  func.func @fta_kernel(%arg0: i32, %arg1: i32, %arg2: memref<1x2x9x8x64xf32, #tpu.memory_space<vmem>>, %arg3: memref<1x8x16xf32, #tpu.memory_space<vmem>>, %arg4: memref<1x1x16xf32, #tpu.memory_space<vmem>>, %arg5: memref<1x2x3x8x64xf32, #tpu.memory_space<vmem>>) attributes {dimension_semantics = [#tpu.dimension_semantics<parallel>, #tpu.dimension_semantics<parallel>], iteration_bounds = array<i64: 2, 1>, scalar_prefetch = 0 : i64, scratch_operands = 0 : i64, tpu.core_type = #tpu.core_type<tc>, window_params = [{transform_indices = @transform_0, window_bounds = array<i64: 1, 2, 9, 8, 64>}, {transform_indices = @transform_1, window_bounds = array<i64: 1, 8, 16>}, {transform_indices = @transform_2, window_bounds = array<i64: 1, 1, 16>}, {transform_indices = @transform_3, window_bounds = array<i64: 1, 2, 3, 8, 64>}]} {
    %c0 = arith.constant 0 : index
    %c0_0 = arith.constant 0 : index
    %c0_1 = arith.constant 0 : index
    %c0_2 = arith.constant 0 : index
    %c0_3 = arith.constant 0 : index
    %0 = vector.load %arg2[%c0, %c0_0, %c0_1, %c0_2, %c0_3] : memref<1x2x9x8x64xf32, #tpu.memory_space<vmem>>, vector<1x2x1x8x64xf32>
    %1 = vector.shape_cast %0 : vector<1x2x1x8x64xf32> to vector<2x8x64xf32>
    %c0_4 = arith.constant 0 : index
    %c0_5 = arith.constant 0 : index
    %c1 = arith.constant 1 : index
    %c0_6 = arith.constant 0 : index
    %c0_7 = arith.constant 0 : index
    %2 = vector.load %arg2[%c0_4, %c0_5, %c1, %c0_6, %c0_7] : memref<1x2x9x8x64xf32, #tpu.memory_space<vmem>>, vector<1x2x1x8x64xf32>
    %3 = vector.shape_cast %2 : vector<1x2x1x8x64xf32> to vector<2x8x64xf32>
    %4 = arith.maximumf %1, %3 : vector<2x8x64xf32>
    %c0_8 = arith.constant 0 : index
    %c0_9 = arith.constant 0 : index
    %c2 = arith.constant 2 : index
    %c0_10 = arith.constant 0 : index
    %c0_11 = arith.constant 0 : index
    %5 = vector.load %arg2[%c0_8, %c0_9, %c2, %c0_10, %c0_11] : memref<1x2x9x8x64xf32, #tpu.memory_space<vmem>>, vector<1x2x1x8x64xf32>
    %6 = vector.shape_cast %5 : vector<1x2x1x8x64xf32> to vector<2x8x64xf32>
    %7 = arith.maximumf %4, %6 : vector<2x8x64xf32>
    %c0_12 = arith.constant 0 : index
    %c0_13 = arith.constant 0 : index
    %c3 = arith.constant 3 : index
    %c0_14 = arith.constant 0 : index
    %c0_15 = arith.constant 0 : index
    %8 = vector.load %arg2[%c0_12, %c0_13, %c3, %c0_14, %c0_15] : memref<1x2x9x8x64xf32, #tpu.memory_space<vmem>>, vector<1x2x1x8x64xf32>
    %9 = vector.shape_cast %8 : vector<1x2x1x8x64xf32> to vector<2x8x64xf32>
    %10 = arith.maximumf %7, %9 : vector<2x8x64xf32>
    %c0_16 = arith.constant 0 : index
    %c0_17 = arith.constant 0 : index
    %c3_18 = arith.constant 3 : index
    %c0_19 = arith.constant 0 : index
    %c0_20 = arith.constant 0 : index
    %11 = vector.load %arg2[%c0_16, %c0_17, %c3_18, %c0_19, %c0_20] : memref<1x2x9x8x64xf32, #tpu.memory_space<vmem>>, vector<1x2x1x8x64xf32>
    %12 = vector.shape_cast %11 : vector<1x2x1x8x64xf32> to vector<2x8x64xf32>
    %c0_21 = arith.constant 0 : index
    %c0_22 = arith.constant 0 : index
    %c4 = arith.constant 4 : index
    %c0_23 = arith.constant 0 : index
    %c0_24 = arith.constant 0 : index
    %13 = vector.load %arg2[%c0_21, %c0_22, %c4, %c0_23, %c0_24] : memref<1x2x9x8x64xf32, #tpu.memory_space<vmem>>, vector<1x2x1x8x64xf32>
    %14 = vector.shape_cast %13 : vector<1x2x1x8x64xf32> to vector<2x8x64xf32>
    %15 = arith.maximumf %12, %14 : vector<2x8x64xf32>
    %c0_25 = arith.constant 0 : index
    %c0_26 = arith.constant 0 : index
    %c5 = arith.constant 5 : index
    %c0_27 = arith.constant 0 : index
    %c0_28 = arith.constant 0 : index
    %16 = vector.load %arg2[%c0_25, %c0_26, %c5, %c0_27, %c0_28] : memref<1x2x9x8x64xf32, #tpu.memory_space<vmem>>, vector<1x2x1x8x64xf32>
    %17 = vector.shape_cast %16 : vector<1x2x1x8x64xf32> to vector<2x8x64xf32>
    %18 = arith.maximumf %15, %17 : vector<2x8x64xf32>
    %c0_29 = arith.constant 0 : index
    %c0_30 = arith.constant 0 : index
    %c2_31 = arith.constant 2 : index
    %c0_32 = arith.constant 0 : index
    %c0_33 = arith.constant 0 : index
    %19 = vector.load %arg2[%c0_29, %c0_30, %c2_31, %c0_32, %c0_33] : memref<1x2x9x8x64xf32, #tpu.memory_space<vmem>>, vector<1x2x1x8x64xf32>
    %20 = vector.shape_cast %19 : vector<1x2x1x8x64xf32> to vector<2x8x64xf32>
    %21 = arith.maximumf %18, %20 : vector<2x8x64xf32>
    %c0_34 = arith.constant 0 : index
    %c0_35 = arith.constant 0 : index
    %c6 = arith.constant 6 : index
    %c0_36 = arith.constant 0 : index
    %c0_37 = arith.constant 0 : index
    %22 = vector.load %arg2[%c0_34, %c0_35, %c6, %c0_36, %c0_37] : memref<1x2x9x8x64xf32, #tpu.memory_space<vmem>>, vector<1x2x1x8x64xf32>
    %23 = vector.shape_cast %22 : vector<1x2x1x8x64xf32> to vector<2x8x64xf32>
    %24 = arith.maximumf %21, %23 : vector<2x8x64xf32>
    %c0_38 = arith.constant 0 : index
    %c0_39 = arith.constant 0 : index
    %c6_40 = arith.constant 6 : index
    %c0_41 = arith.constant 0 : index
    %c0_42 = arith.constant 0 : index
    %25 = vector.load %arg2[%c0_38, %c0_39, %c6_40, %c0_41, %c0_42] : memref<1x2x9x8x64xf32, #tpu.memory_space<vmem>>, vector<1x2x1x8x64xf32>
    %26 = vector.shape_cast %25 : vector<1x2x1x8x64xf32> to vector<2x8x64xf32>
    %c0_43 = arith.constant 0 : index
    %c0_44 = arith.constant 0 : index
    %c7 = arith.constant 7 : index
    %c0_45 = arith.constant 0 : index
    %c0_46 = arith.constant 0 : index
    %27 = vector.load %arg2[%c0_43, %c0_44, %c7, %c0_45, %c0_46] : memref<1x2x9x8x64xf32, #tpu.memory_space<vmem>>, vector<1x2x1x8x64xf32>
    %28 = vector.shape_cast %27 : vector<1x2x1x8x64xf32> to vector<2x8x64xf32>
    %29 = arith.maximumf %26, %28 : vector<2x8x64xf32>
    %c0_47 = arith.constant 0 : index
    %c0_48 = arith.constant 0 : index
    %c8 = arith.constant 8 : index
    %c0_49 = arith.constant 0 : index
    %c0_50 = arith.constant 0 : index
    %30 = vector.load %arg2[%c0_47, %c0_48, %c8, %c0_49, %c0_50] : memref<1x2x9x8x64xf32, #tpu.memory_space<vmem>>, vector<1x2x1x8x64xf32>
    %31 = vector.shape_cast %30 : vector<1x2x1x8x64xf32> to vector<2x8x64xf32>
    %32 = arith.maximumf %29, %31 : vector<2x8x64xf32>
    %c0_51 = arith.constant 0 : index
    %c0_52 = arith.constant 0 : index
    %c5_53 = arith.constant 5 : index
    %c0_54 = arith.constant 0 : index
    %c0_55 = arith.constant 0 : index
    %33 = vector.load %arg2[%c0_51, %c0_52, %c5_53, %c0_54, %c0_55] : memref<1x2x9x8x64xf32, #tpu.memory_space<vmem>>, vector<1x2x1x8x64xf32>
    %34 = vector.shape_cast %33 : vector<1x2x1x8x64xf32> to vector<2x8x64xf32>
    %35 = arith.maximumf %32, %34 : vector<2x8x64xf32>
    %36 = vector.shape_cast %7 : vector<2x8x64xf32> to vector<2x1x8x64xf32>
    %37 = vector.shape_cast %18 : vector<2x8x64xf32> to vector<2x1x8x64xf32>
    %38 = vector.shape_cast %32 : vector<2x8x64xf32> to vector<2x1x8x64xf32>
    %39 = tpu.concatenate %36, %37, %38 in 1 : vector<2x1x8x64xf32>, vector<2x1x8x64xf32>, vector<2x1x8x64xf32> -> vector<2x3x8x64xf32>
    %40 = vector.shape_cast %10 : vector<2x8x64xf32> to vector<2x1x8x64xf32>
    %41 = vector.shape_cast %24 : vector<2x8x64xf32> to vector<2x1x8x64xf32>
    %42 = vector.shape_cast %35 : vector<2x8x64xf32> to vector<2x1x8x64xf32>
    %43 = tpu.concatenate %40, %41, %42 in 1 : vector<2x1x8x64xf32>, vector<2x1x8x64xf32>, vector<2x1x8x64xf32> -> vector<2x3x8x64xf32>
    %44 = arith.addf %39, %43 : vector<2x3x8x64xf32>
    %cst = arith.constant dense<0.000000e+00> : vector<2x3x8xf32>
    %45 = vector.multi_reduction <add>, %44, %cst [3] : vector<2x3x8x64xf32> to vector<2x3x8xf32>
    %cst_56 = arith.constant 6.400000e+01 : f32
    %46 = vector.broadcast %cst_56 : f32 to vector<2x3x8xf32>
    %47 = arith.divf %45, %46 : vector<2x3x8xf32>
    %48 = vector.shape_cast %47 : vector<2x3x8xf32> to vector<6x8xf32>
    %c0_57 = arith.constant 0 : index
    %c0_58 = arith.constant 0 : index
    %c0_59 = arith.constant 0 : index
    %49 = vector.load %arg3[%c0_57, %c0_58, %c0_59] : memref<1x8x16xf32, #tpu.memory_space<vmem>>, vector<1x8x16xf32>
    %50 = vector.shape_cast %49 : vector<1x8x16xf32> to vector<8x16xf32>
    %cst_60 = arith.constant dense<0.000000e+00> : vector<6x16xf32>
    %51 = tpu.matmul %48, %50, %cst_60 {dimension_numbers = #tpu.dot_dimension_numbers<[1], [0], [0], [1], [0, 0, 1, 1], [], []>} : vector<6x8xf32>, vector<8x16xf32>, vector<6x16xf32> -> vector<6x16xf32>
    %c0_61 = arith.constant 0 : index
    %c0_62 = arith.constant 0 : index
    %c0_63 = arith.constant 0 : index
    %52 = vector.load %arg4[%c0_61, %c0_62, %c0_63] : memref<1x1x16xf32, #tpu.memory_space<vmem>>, vector<1x1x16xf32>
    %53 = vector.shape_cast %52 : vector<1x1x16xf32> to vector<1x16xf32>
    %54 = vector.broadcast %53 : vector<1x16xf32> to vector<6x16xf32>
    %55 = arith.addf %51, %54 : vector<6x16xf32>
    %56 = vector.extract_strided_slice %55 {offsets = [0, 0], sizes = [6, 8], strides = [1, 1]} : vector<6x16xf32> to vector<6x8xf32>
    %57 = vector.extract_strided_slice %55 {offsets = [0, 8], sizes = [6, 8], strides = [1, 1]} : vector<6x16xf32> to vector<6x8xf32>
    %58 = arith.maximumf %56, %57 : vector<6x8xf32>
    %59 = arith.subf %56, %58 : vector<6x8xf32>
    %60 = math.exp %59 : vector<6x8xf32>
    %61 = arith.subf %57, %58 : vector<6x8xf32>
    %62 = math.exp %61 : vector<6x8xf32>
    %63 = arith.addf %60, %62 : vector<6x8xf32>
    %64 = tpu.reciprocal %63 : vector<6x8xf32> -> vector<6x8xf32>
    %65 = arith.mulf %60, %64 : vector<6x8xf32>
    %66 = vector.shape_cast %65 : vector<6x8xf32> to vector<2x3x8xf32>
    %67 = vector.shape_cast %66 : vector<2x3x8xf32> to vector<2x3x8x1xf32>
    %68 = arith.mulf %62, %64 : vector<6x8xf32>
    %69 = vector.shape_cast %68 : vector<6x8xf32> to vector<2x3x8xf32>
    %70 = vector.shape_cast %69 : vector<2x3x8xf32> to vector<2x3x8x1xf32>
    %71 = vector.broadcast %67 : vector<2x3x8x1xf32> to vector<2x3x8x64xf32>
    %72 = arith.mulf %71, %39 : vector<2x3x8x64xf32>
    %73 = vector.broadcast %70 : vector<2x3x8x1xf32> to vector<2x3x8x64xf32>
    %74 = arith.mulf %73, %43 : vector<2x3x8x64xf32>
    %75 = arith.addf %72, %74 : vector<2x3x8x64xf32>
    %c0_64 = arith.constant 0 : index
    %c0_65 = arith.constant 0 : index
    %c0_66 = arith.constant 0 : index
    %c0_67 = arith.constant 0 : index
    %c0_68 = arith.constant 0 : index
    %76 = vector.load %arg5[%c0_64, %c0_65, %c0_66, %c0_67, %c0_68] : memref<1x2x3x8x64xf32, #tpu.memory_space<vmem>>, vector<1x2x3x8x64xf32>
    %77 = vector.shape_cast %76 : vector<1x2x3x8x64xf32> to vector<2x3x8x64xf32>
    %78 = vector.shape_cast %75 : vector<2x3x8x64xf32> to vector<1x2x3x8x64xf32>
    tpu.vector_store %arg5[%c0_64, %c0_65, %c0_66, %c0_67, %c0_68], %78 {strides = array<i32>} : memref<1x2x3x8x64xf32, #tpu.memory_space<vmem>>, vector<1x2x3x8x64xf32>,
    return
  }
  func.func @transform_0(%arg0: i32, %arg1: i32) -> (i32, i32, i32, i32, i32) {
    %c0_i32 = arith.constant 0 : i32
    %c0_i32_0 = arith.constant 0 : i32
    %c0_i32_1 = arith.constant 0 : i32
    %c0_i32_2 = arith.constant 0 : i32
    return %arg0, %arg1, %c0_i32, %c0_i32_0, %c0_i32_1 : i32, i32, i32, i32, i32
  }
  func.func @transform_1(%arg0: i32, %arg1: i32) -> (i32, i32, i32) {
    %c0_i32 = arith.constant 0 : i32
    %c0_i32_0 = arith.constant 0 : i32
    %c0_i32_1 = arith.constant 0 : i32
    return %arg0, %c0_i32, %c0_i32_0 : i32, i32, i32
  }
  func.func @transform_2(%arg0: i32, %arg1: i32) -> (i32, i32, i32) {
    %c0_i32 = arith.constant 0 : i32
    %c0_i32_0 = arith.constant 0 : i32
    %c0_i32_1 = arith.constant 0 : i32
    return %arg0, %c0_i32, %c0_i32_0 : i32, i32, i32
  }
  func.func @transform_3(%arg0: i32, %arg1: i32) -> (i32, i32, i32, i32, i32) {
    %c0_i32 = arith.constant 0 : i32
    %c0_i32_0 = arith.constant 0 : i32
    %c0_i32_1 = arith.constant 0 : i32
    %c0_i32_2 = arith.constant 0 : i32
    return %arg0, %arg1, %c0_i32, %c0_i32_0, %c0_i32_1 : i32, i32, i32, i32, i32
  }
}

</mosaic_0001>

<llo_original>
// kernel: tpu_custom_call.1
$region0: #{tpu_custom_call.1}
  #allocation0 [shape = 'u32[]', space=smem, size = 0x4, offset = 0x4, fixed_abs, tag = 'smem constant byte address 0x4 - core index']
  #allocation1 [shape = 'u32[144,128]{1,0:T(1,128)}', space=vmem, size = 0x12000, scoped, tag = 'internal scratch']
  %s0 = inlined_call_operand.hbm [shape: f32[2,2,9,8,64], index: 0, kind: input, shape index: {}]
  %s1 = inlined_call_operand.hbm [shape: f32[2,8,16], index: 1, kind: input, shape index: {}]
  %s2 = inlined_call_operand.vmem [shape: f32[2,1,16], index: 2, kind: input, shape index: {}]
  %s3 = inlined_call_operand.hbm [shape: f32[2,2,3,8,64], index: 3, kind: output, shape index: {}]
  %s4 = sld [smem:[#allocation0]]
  $region53: #{tpu_custom_call.1} parent=0
    _
  %s6 = ssub.s32 1, %s4
  %s7 = scalar_select 0, %s6, %s4
  $region1: #{tpu_custom_call.1} parent=0
    #allocation2 [shape = 'u8[147456]{0}', space=vmem, size = 0x24000, scoped, tag = 'input window, operand 0']
    #allocation3 [shape = 's32[2]{0}', space=sflag, size = 0x8, scoped, tag = 'scoped memory for tpu_custom_call.1']
    #allocation4 [shape = 's32[2]{0}', space=sflag, size = 0x8, scoped, tag = 'scoped memory for tpu_custom_call.1']
    #allocation5 [shape = 'u8[8192]{0}', space=vmem, size = 0x2000, scoped, tag = 'input window, operand 1']
    #allocation6 [shape = 's32[2]{0}', space=sflag, size = 0x8, scoped, tag = 'scoped memory for tpu_custom_call.1']
    #allocation7 [shape = 'u8[49152]{0}', space=vmem, size = 0xc000, scoped, tag = 'output window, operand 0']
    %8 = vsyncpa [#allocation3], 0
    %s9 = scalar_lea.sflag [#allocation3], 1
    %10 = vsyncpa %s9, 0
    %11 = vsyncpa [#allocation6], 0
    %s12 = scalar_lea.sflag [#allocation6], 1
    %13 = vsyncpa %s12, 0
    %14 = vsyncpa [#allocation4], 0
    %s15 = scalar_lea.sflag [#allocation4], 1
    %16 = vsyncpa %s15, 0
    loop: start=0, step=1, limit=4
    $region2: #{tpu_custom_call.1} parent=1 // loop_pre_header
      _
    $region3: #{tpu_custom_call.1} parent=1 // loop_header
      %s18 = sphi 0, %s22
      %p19 = scmp.ge.s32.totalorder %s18, 4
      %s25 = sphi 0, %s37
      %s26 = sphi 0, %s33
      %s27 = sphi 0, %s25
      %s28 = sphi 0, %s26
      %s29 = sphi 0, %s27
      %s30 = sphi 0, %s28
      %s42 = sphi 0, %s44
      %s45 = sphi 0, %s42
      %s46 = sphi 0, %s45
      %s62 = sphi 0, %s46
      %s68 = sphi 0, %s70
      %s71 = sphi 0, %s68
      %s72 = sphi 0, %s71
      %s88 = sphi 0, %s72
      %s94 = sphi 0, %s96
      %s97 = sphi 0, %s94
      %s98 = sphi 0, %s97
      %s114 = sphi 0, %s98
      %s122 = sphi 0, %s124
      %s125 = sphi 0, %s122
      %s126 = sphi 0, %s125
      %s142 = sphi 0, %s126
    $region4: #{tpu_custom_call.1} parent=1 // loop_header_branch
      %21 = sbr.rel (%p19) target = $region8
    $region5: #{tpu_custom_call.1} parent=1 // loop_body
      %s23 = ssub.s32 %s18, 1
      %s24 = ssub.s32 %s18, 2
      %s31 = sadd.s32 1, %s26
      %p32 = scmp.ge.s32.totalorder %s31, 1
      %s33 = scalar_select %p32, 0, %s31
      %s34 = sadd.s32 1, %s25
      %s35 = scalar_select %p32, %s34, %s25
      %p36 = scmp.ge.s32.totalorder %s35, 2
      %s37 = scalar_select %p36, 0, %s35
      %s38 = ssub.s32 %s25, %s37
      %s39 = ssub.s32 %s26, %s33
      %s40 = sor.u32 %s38, %s39
      %p41 = scmp.eq.s32.totalorder %s40, 0
      %s43 = sadd.s32 %s42, 1
      %s44 = scalar_select %p41, %s42, %s43
      %p47 = pneg %p41
      %p48 = scmp.eq.s32.totalorder %s18, 1
      %p49 = por %p47, %p48
      %p50 = scmp.ne.s32.totalorder %s42, %s45
      %p51 = scmp.eq.s32.totalorder %s18, 0
      %p52 = por %p50, %p51
      %p53 = scmp.ne.s32.totalorder %s42, %s45
      %p54 = scmp.eq.s32.totalorder %s23, 1
      %p55 = por %p53, %p54
      %p56 = scmp.ne.s32.totalorder %s45, %s46
      %p57 = scmp.eq.s32.totalorder %s23, 0
      %p58 = por %p56, %p57
      %p59 = scmp.ne.s32.totalorder %s45, %s46
      %p60 = scmp.eq.s32.totalorder %s24, 1
      %p61 = por %p59, %p60
      %p63 = scmp.ne.s32.totalorder %s46, %s62
      %p64 = scmp.eq.s32.totalorder %s24, 0
      %p65 = por %p63, %p64
      %s66 = ssub.s32 %s25, %s37
      %p67 = scmp.eq.s32.totalorder %s66, 0
      %s69 = sadd.s32 %s68, 1
      %s70 = scalar_select %p67, %s68, %s69
      %p73 = pneg %p67
      %p74 = scmp.eq.s32.totalorder %s18, 1
      %p75 = por %p73, %p74
      %p76 = scmp.ne.s32.totalorder %s68, %s71
      %p77 = scmp.eq.s32.totalorder %s18, 0
      %p78 = por %p76, %p77
      %p79 = scmp.ne.s32.totalorder %s68, %s71
      %p80 = scmp.eq.s32.totalorder %s23, 1
      %p81 = por %p79, %p80
      %p82 = scmp.ne.s32.totalorder %s71, %s72
      %p83 = scmp.eq.s32.totalorder %s23, 0
      %p84 = por %p82, %p83
      %p85 = scmp.ne.s32.totalorder %s71, %s72
      %p86 = scmp.eq.s32.totalorder %s24, 1
      %p87 = por %p85, %p86
      %p89 = scmp.ne.s32.totalorder %s72, %s88
      %p90 = scmp.eq.s32.totalorder %s24, 0
      %p91 = por %p89, %p90
      %s92 = ssub.s32 %s25, %s37
      %p93 = scmp.eq.s32.totalorder %s92, 0
      %s95 = sadd.s32 %s94, 1
      %s96 = scalar_select %p93, %s94, %s95
      %p99 = pneg %p93
      %p100 = scmp.eq.s32.totalorder %s18, 1
      %p101 = por %p99, %p100
      %p102 = scmp.ne.s32.totalorder %s94, %s97
      %p103 = scmp.eq.s32.totalorder %s18, 0
      %p104 = por %p102, %p103
      %p105 = scmp.ne.s32.totalorder %s94, %s97
      %p106 = scmp.eq.s32.totalorder %s23, 1
      %p107 = por %p105, %p106
      %p108 = scmp.ne.s32.totalorder %s97, %s98
      %p109 = scmp.eq.s32.totalorder %s23, 0
      %p110 = por %p108, %p109
      %p111 = scmp.ne.s32.totalorder %s97, %s98
      %p112 = scmp.eq.s32.totalorder %s24, 1
      %p113 = por %p111, %p112
      %p115 = scmp.ne.s32.totalorder %s98, %s114
      %p116 = scmp.eq.s32.totalorder %s24, 0
      %p117 = por %p115, %p116
      %s118 = ssub.s32 %s25, %s37
      %s119 = ssub.s32 %s26, %s33
      %s120 = sor.u32 %s118, %s119
      %p121 = scmp.eq.s32.totalorder %s120, 0
      %s123 = sadd.s32 %s122, 1
      %s124 = scalar_select %p121, %s122, %s123
      %p127 = pneg %p121
      %p128 = scmp.eq.s32.totalorder %s18, 1
      %p129 = por %p127, %p128
      %p130 = scmp.ne.s32.totalorder %s122, %s125
      %p131 = scmp.eq.s32.totalorder %s18, 0
      %p132 = por %p130, %p131
      %p133 = scmp.ne.s32.totalorder %s122, %s125
      %p134 = scmp.eq.s32.totalorder %s23, 1
      %p135 = por %p133, %p134
      %p136 = scmp.ne.s32.totalorder %s125, %s126
      %p137 = scmp.eq.s32.totalorder %s23, 0
      %p138 = por %p136, %p137
      %p139 = scmp.ne.s32.totalorder %s125, %s126
      %p140 = scmp.eq.s32.totalorder %s24, 1
      %p141 = por %p139, %p140
      %p143 = scmp.ne.s32.totalorder %s126, %s142
      %p144 = scmp.eq.s32.totalorder %s24, 0
      %p145 = por %p143, %p144
      %p146 = scmp.le.s32.totalorder 1, %s18
      %p147 = scmp.lt.s32.totalorder %s18, 3
      %p148 = pnand %p146, %p147
      %p149 = pneg %p148
      // Predicated region
      $region9: #{tpu_custom_call.1} parent=5 // pred_check
        _
      $region10: #{tpu_custom_call.1} parent=5 // pred_check_branch
        %151 = sbr.rel (%p148) target = $region12
      $region11: #{tpu_custom_call.1} parent=5 // pred_region
        %s152 = ssub.s32 %s18, 1
      $region12: #{tpu_custom_call.1} parent=5 // pred_fallthru
        _
      %p153 = scmp.lt.s32.totalorder %s18, 2
      // Predicated region
      $region13: #{tpu_custom_call.1} parent=5 // pred_check
        %p154 = pneg %p153
      $region14: #{tpu_custom_call.1} parent=5 // pred_check_branch
        %156 = sbr.rel (%p154) target = $region16
      $region15: #{tpu_custom_call.1} parent=5 // pred_region
        // Predicated region
        $region17: #{tpu_custom_call.1} parent=15 // pred_check
          %p157 = pneg %p52
        $region18: #{tpu_custom_call.1} parent=15 // pred_check_branch
          %159 = sbr.rel (%p157) target = $region20
        $region19: #{tpu_custom_call.1} parent=15 // pred_region
          %s160 = sand.u32 %s42, 1
          %s161 = scalar_lea.sflag [#allocation3], %s160
          %s162 = sand.u32 %s42, 1
          %s163 = smul.addr %s162, 144
          %s164 = scalar_lea.vmem [#allocation2], %s163
          %s165 = smul.u32 2, %s26
          %s167 = ssub.s32 2304, 2304
          %168 = vsyncadd %s161, %s167
          %s169 = smul.addr %s165, 9
          %s170 = smul.addr %s25, 18
          %s171 = sadd.s32 %s169, %s170
          %s172 = smul.addr %s171, 128
          %s173 = scalar_lea.hbm %s0, %s172
          %s174 = sshll.u32 %s164, 4
          %s175 = int_to_ptr.vmem [resolvable:$true] %s174
          %180 = dma.hbm_to_vmem [thread:$0]  %s173, 2304, %s175, %s161, 128, 128, 8
        $region20: #{tpu_custom_call.1} parent=15 // pred_fallthru
          _
        // Predicated region
        $region21: #{tpu_custom_call.1} parent=15 // pred_check
          %p181 = pneg %p78
        $region22: #{tpu_custom_call.1} parent=15 // pred_check_branch
          %183 = sbr.rel (%p181) target = $region24
        $region23: #{tpu_custom_call.1} parent=15 // pred_region
          %s184 = sand.u32 %s68, 1
          %s185 = scalar_lea.sflag [#allocation6], %s184
          %s186 = sand.u32 %s68, 1
          %s187 = smul.addr %s186, 8
          %s188 = scalar_lea.vmem [#allocation5], %s187
          %s190 = ssub.s32 128, 128
          %191 = vsyncadd %s185, %s190
          %s192 = smul.addr %s25, 128
          %s193 = scalar_lea.hbm %s1, %s192
          %s195 = sshll.u32 %s188, 4
          %s196 = int_to_ptr.vmem [resolvable:$true] %s195
          %198 = dma.hbm_to_vmem [thread:$0]  %s193, 128, %s196, %s185
        $region24: #{tpu_custom_call.1} parent=15 // pred_fallthru
          _
        // Predicated region
        $region25: #{tpu_custom_call.1} parent=15 // pred_check
          %p199 = pneg %p104
        $region26: #{tpu_custom_call.1} parent=15 // pred_check_branch
          %201 = sbr.rel (%p199) target = $region28
        $region27: #{tpu_custom_call.1} parent=15 // pred_region
          %p202 = scmp.lt.s32.totalorder %s25, 1
          %s203 = scalar_select %p202, %s25, 1
          %s204 = scalar_lea.vmem %s2, %s203
        $region28: #{tpu_custom_call.1} parent=15 // pred_fallthru
          _
      $region16: #{tpu_custom_call.1} parent=5 // pred_fallthru
        _
      %p205 = scmp.le.s32.totalorder 1, %s18
      %p206 = scmp.lt.s32.totalorder %s18, 3
      %p207 = pnand %p205, %p206
      %p208 = pneg %p207
      // Predicated region
      $region29: #{tpu_custom_call.1} parent=5 // pred_check
        _
      $region30: #{tpu_custom_call.1} parent=5 // pred_check_branch
        %210 = sbr.rel (%p207) target = $region32
      $region31: #{tpu_custom_call.1} parent=5 // pred_region
        %s211 = ssub.s32 %s18, 1
        %s212 = sand.u32 %s45, 1
        %s213 = scalar_lea.sflag [#allocation3], %s212
        %s214 = sand.u32 %s45, 1
        %s215 = smul.addr %s214, 144
        %s216 = scalar_lea.vmem [#allocation2], %s215
        // Predicated region
        $region33: #{tpu_custom_call.1} parent=31 // pred_check
          %p217 = pneg %p58
        $region34: #{tpu_custom_call.1} parent=31 // pred_check_branch
          %219 = sbr.rel (%p217) target = $region36
        $region35: #{tpu_custom_call.1} parent=31 // pred_region
          %220 = dma.done %s213, 2304
        $region36: #{tpu_custom_call.1} parent=31 // pred_fallthru
          _
        %s221 = sand.u32 %s71, 1
        %s222 = scalar_lea.sflag [#allocation6], %s221
        %s223 = sand.u32 %s71, 1
        %s224 = smul.addr %s223, 8
        %s225 = scalar_lea.vmem [#allocation5], %s224
        // Predicated region
        $region37: #{tpu_custom_call.1} parent=31 // pred_check
          %p226 = pneg %p84
        $region38: #{tpu_custom_call.1} parent=31 // pred_check_branch
          %228 = sbr.rel (%p226) target = $region40
        $region39: #{tpu_custom_call.1} parent=31 // pred_region
          %229 = dma.done %s222, 128
        $region40: #{tpu_custom_call.1} parent=31 // pred_fallthru
          _
        %s230 = sand.u32 %s45, 1
        %s231 = scalar_lea.sflag [#allocation3], %s230
        %s232 = sand.u32 %s45, 1
        %s233 = smul.addr %s232, 144
        %s234 = scalar_lea.vmem [#allocation2], %s233
        %p235 = pneg %p58
        %p236 = pneg %p55
        %s237 = sand.u32 %s71, 1
        %s238 = scalar_lea.sflag [#allocation6], %s237
        %s239 = sand.u32 %s71, 1
        %s240 = smul.addr %s239, 8
        %s241 = scalar_lea.vmem [#allocation5], %s240
        %p242 = pneg %p84
        %p243 = pneg %p81
        %p244 = scmp.lt.s32.totalorder %s27, 1
        %s245 = scalar_select %p244, %s27, 1
        %s246 = scalar_lea.vmem %s2, %s245
        %p247 = pneg %p110
        %p248 = pneg %p107
        %p249 = pneg %p138
        %p250 = pneg %p135
        %s251 = sand.u32 %s125, 1
        %s252 = scalar_lea.sflag [#allocation4], %s251
        %s253 = sand.u32 %s125, 1
        %s254 = smul.addr %s253, 48
        %s255 = scalar_lea.vmem [#allocation7], %s254
        %s256 = smul.u32 2, %s28
        %p257 = scmp.lt.s32.totalorder %s27, 1
        %s258 = scalar_select %p257, %s27, 1
        %s259 = scalar_lea.vmem %s2, %s258
        %s260 = smul.u32 2, %s28
        %v261 = vld [vmem:[%s216] sm:$0xff]
        %v262 = vld [vmem:[%s216 + $0x48] sm:$0xff]
        %s263 = scalar_lea.vmem %s216, 8 [#allocation2]
        %v264 = vld [vmem:[%s263] sm:$0xff]
        %v265 = vld [vmem:[%s263 + $0x48] sm:$0xff]
        %v266 = vmax.f32 %v261, %v264
        %v267 = vmax.f32 %v262, %v265
        %s268 = scalar_lea.vmem %s216, 16 [#allocation2]
        %v269 = vld [vmem:[%s268] sm:$0xff]
        %v270 = vld [vmem:[%s268 + $0x48] sm:$0xff]
        %v271 = vmax.f32 %v266, %v269
        %v272 = vmax.f32 %v267, %v270
        %s273 = scalar_lea.vmem %s216, 24 [#allocation2]
        %v274 = vld [vmem:[%s273] sm:$0xff]
        %v275 = vld [vmem:[%s273 + $0x48] sm:$0xff]
        %v276 = vmax.f32 %v271, %v274
        %v277 = vmax.f32 %v272, %v275
        %s278 = scalar_lea.vmem %s216, 32 [#allocation2]
        %v279 = vld [vmem:[%s278] sm:$0xff]
        %v280 = vld [vmem:[%s278 + $0x48] sm:$0xff]
        %v281 = vmax.f32 %v274, %v279
        %v282 = vmax.f32 %v275, %v280
        %s283 = scalar_lea.vmem %s216, 40 [#allocation2]
        %v284 = vld [vmem:[%s283] sm:$0xff]
        %v285 = vld [vmem:[%s283 + $0x48] sm:$0xff]
        %v286 = vmax.f32 %v281, %v284
        %v287 = vmax.f32 %v282, %v285
        %v288 = vmax.f32 %v286, %v269
        %v289 = vmax.f32 %v287, %v270
        %s290 = scalar_lea.vmem %s216, 48 [#allocation2]
        %v291 = vld [vmem:[%s290] sm:$0xff]
        %v292 = vld [vmem:[%s290 + $0x48] sm:$0xff]
        %v293 = vmax.f32 %v288, %v291
        %v294 = vmax.f32 %v289, %v292
        %s295 = scalar_lea.vmem %s216, 56 [#allocation2]
        %v296 = vld [vmem:[%s295] sm:$0xff]
        %v297 = vld [vmem:[%s295 + $0x48] sm:$0xff]
        %v298 = vmax.f32 %v291, %v296
        %v299 = vmax.f32 %v292, %v297
        %s300 = scalar_lea.vmem %s216, 64 [#allocation2]
        %v301 = vld [vmem:[%s300] sm:$0xff]
        %v302 = vld [vmem:[%s300 + $0x48] sm:$0xff]
        %v303 = vmax.f32 %v298, %v301
        %v304 = vmax.f32 %v299, %v302
        %v305 = vmax.f32 %v303, %v284
        %v306 = vmax.f32 %v304, %v285
        %v307 = vadd.f32 %v271, %v276
        %v308 = vadd.f32 %v286, %v293
        %v309 = vadd.f32 %v303, %v305
        %v310 = vadd.f32 %v272, %v277
        %v311 = vadd.f32 %v287, %v294
        %v312 = vadd.f32 %v304, %v306
        %vm313 = vcmask 523264
        %v314 = vsel %vm313, %v307, 0.0
        %315 = vadd.xlane.f32.xlu0 %v314
        %v316 = vpop.xlane.xlu0 %315
        %v317 = vsel %vm313, %v308, 0.0
        %318 = vadd.xlane.f32.xlu0 %v317
        %v319 = vpop.xlane.xlu0 %318
        %v320 = vsel %vm313, %v309, 0.0
        %321 = vadd.xlane.f32.xlu0 %v320
        %v322 = vpop.xlane.xlu0 %321
        %v323 = vsel %vm313, %v310, 0.0
        %324 = vadd.xlane.f32.xlu0 %v323
        %v325 = vpop.xlane.xlu0 %324
        %v326 = vsel %vm313, %v311, 0.0
        %327 = vadd.xlane.f32.xlu0 %v326
        %v328 = vpop.xlane.xlu0 %327
        %v329 = vsel %vm313, %v312, 0.0
        %330 = vadd.xlane.f32.xlu0 %v329
        %v331 = vpop.xlane.xlu0 %330
        %v332 = vrcp.pop 64.0
        %v333 = vmul.f32 %v316, %v332
        %v334 = vmul.f32 %v319, %v332
        %v335 = vmul.f32 %v322, %v332
        %v336 = vmul.f32 %v325, %v332
        %v337 = vmul.f32 %v328, %v332
        %v338 = vmul.f32 %v331, %v332
        %v339 = vld [vmem:[%s225] sm:$0xff]
        %v340 = vld [vmem:[%s259] sm:$0x1]
        %v342 = vlaneseq
        %v343 = vshrl.u32 %v342, 7
        %v344 = vsub.s32 0, %v343
        %v345 = vrot.slane %v340, %v344
        %v353 = vlaneseq
        %v354 = vand.u32 %v353, 127
        %v355 = vlaneseq
        %v356 = vshrl.u32 %v355, 7
        %v357 = vsub.s32 %v354, %v356
        %v358 = vrot.slane %v333, %v357
        %v359 = vlaneseq
        %v360 = vshrl.u32 %v359, 7
        %v361 = vsub.s32 %v354, %v360
        %v362 = vrot.slane %v334, %v361
        %v363 = vlaneseq
        %v364 = vshrl.u32 %v363, 7
        %v365 = vsub.s32 %v354, %v364
        %v366 = vrot.slane %v335, %v365
        %v367 = vlaneseq
        %v368 = vshrl.u32 %v367, 7
        %v369 = vsub.s32 %v354, %v368
        %v370 = vrot.slane %v336, %v369
        %v371 = vlaneseq
        %v372 = vshrl.u32 %v371, 7
        %v373 = vsub.s32 %v354, %v372
        %v374 = vrot.slane %v337, %v373
        %v375 = vlaneseq
        %v376 = vshrl.u32 %v375, 7
        %v377 = vsub.s32 %v354, %v376
        %v378 = vrot.slane %v338, %v377
        %vm379 = vcmask 1041409
        %v380 = vsel %vm379, %v362, %v358
        %vm381 = vcmask 1042434
        %v382 = vsel %vm381, %v366, %v380
        %vm383 = vcmask 1043459
        %v384 = vsel %vm383, %v370, %v382
        %vm385 = vcmask 1044484
        %v386 = vsel %vm385, %v374, %v384
        %vm387 = vcmask 1045509
        %v388 = vsel %vm387, %v378, %v386
        %vm389 = vcmask 64512
        %v390 = vsel %vm389, %v388, 0
        %392 = vmatprep.subr.mxu0 0.0
        %393 = vmatpush1.msra.mxu0 0.0
        %394 = vmatprep.subr.mxu0 0.0
        %395 = vmatpush1.msra.mxu0 0.0
        %396 = vmatprep.subr.mxu0 0.0
        %397 = vmatpush1.msra.mxu0 0.0
        %398 = vmatprep.subr.mxu0 0.0
        %399 = vmatpush1.msra.mxu0 0.0
        %400 = vmatprep.subr.mxu0 0.0
        %401 = vmatpush1.msra.mxu0 0.0
        %402 = vmatprep.subr.mxu0 0.0
        %403 = vmatpush1.msra.mxu0 0.0
        %404 = vmatprep.subr.mxu0 0.0
        %405 = vmatpush1.msra.mxu0 0.0
        %406 = vmatprep.subr.mxu0 0.0
        %407 = vmatpush1.msra.mxu0 0.0
        %408 = vmatprep.subr.mxu0 0.0
        %409 = vmatpush1.msra.mxu0 0.0
        %410 = vmatprep.subr.mxu0 0.0
        %411 = vmatpush1.msra.mxu0 0.0
        %412 = vmatprep.subr.mxu0 0.0
        %413 = vmatpush1.msra.mxu0 0.0
        %414 = vmatprep.subr.mxu0 0.0
        %415 = vmatpush1.msra.mxu0 0.0
        %416 = vmatprep.subr.mxu0 0.0
        %417 = vmatpush1.msra.mxu0 0.0
        %418 = vmatprep.subr.mxu0 0.0
        %419 = vmatpush1.msra.mxu0 0.0
        %420 = vmatprep.subr.mxu0 0.0
        %421 = vmatpush1.msra.mxu0 0.0
        %422 = vmatprep.subr.mxu0 0.0
        %423 = vmatpush1.msra.mxu0 %v339
        %424 = vmatprep.subr.mxu0 0.0
        %425 = vmatpush2.msra.mxu0 0.0
        %426 = vmatprep.subr.mxu0 0.0
        %427 = vmatpush2.msra.mxu0 0.0
        %428 = vmatprep.subr.mxu0 0.0
        %429 = vmatpush2.msra.mxu0 0.0
        %430 = vmatprep.subr.mxu0 0.0
        %431 = vmatpush2.msra.mxu0 0.0
        %432 = vmatprep.subr.mxu0 0.0
        %433 = vmatpush2.msra.mxu0 0.0
        %434 = vmatprep.subr.mxu0 0.0
        %435 = vmatpush2.msra.mxu0 0.0
        %436 = vmatprep.subr.mxu0 0.0
        %437 = vmatpush2.msra.mxu0 0.0
        %438 = vmatprep.subr.mxu0 0.0
        %439 = vmatpush2.msra.mxu0 0.0
        %440 = vmatprep.subr.mxu0 0.0
        %441 = vmatpush2.msra.mxu0 0.0
        %442 = vmatprep.subr.mxu0 0.0
        %443 = vmatpush2.msra.mxu0 0.0
        %444 = vmatprep.subr.mxu0 0.0
        %445 = vmatpush2.msra.mxu0 0.0
        %446 = vmatprep.subr.mxu0 0.0
        %447 = vmatpush2.msra.mxu0 0.0
        %448 = vmatprep.subr.mxu0 0.0
        %449 = vmatpush2.msra.mxu0 0.0
        %450 = vmatprep.subr.mxu0 0.0
        %451 = vmatpush2.msra.mxu0 0.0
        %452 = vmatprep.subr.mxu0 0.0
        %453 = vmatpush2.msra.mxu0 0.0
        %454 = vmatprep.subr.mxu0 0.0
        %455 = vmatpush2.msra.mxu0 0.0
        %456 = vmatprep.mubr.f32.mxu0 0.0
        %457 = vmatmul.mubr.f32.gmra.mxu0 %v390
        %v458 = vpop.f32.mrf.mxu0
        %v459 = vadd.f32 %v345, %v458
        %v460 = vpop.f32.mrf.mxu0
        %461 = vdwg.mxu0
        %463 = vrot.lane.b32.xlu0 %v459, 120
        %v464 = vpop.permute.xlu0 %463
        %v466 = vmax.f32 %v459, %v464
        %v467 = vsub.f32 %v459, %v466
        %v468 = vmul.f32 %v467, 1.442695
        %v469 = vpow.pop %v468
        %471 = vrot.lane.b32.xlu0 %v466, 8
        %v472 = vpop.permute.xlu0 %471
        %v474 = vsub.f32 %v459, %v472
        %v475 = vmul.f32 %v474, 1.442695
        %v476 = vpow.pop %v475
        %478 = vrot.lane.b32.xlu0 %v476, 120
        %v479 = vpop.permute.xlu0 %478
        %v481 = vadd.f32 %v469, %v479
        %v482 = vrcp.pop %v481
        %v483 = vmul.f32 %v469, %v482
        %v484 = vlaneseq
        %v485 = vshrl.u32 %v484, 7
        %v486 = vsub.s32 0, %v485
        %v487 = vrot.slane %v483, %v486
        %489 = vbcast.lane.b32.xlu0 %v487, 256
        %v490 = vpop.permute.xlu0 %489
        %v491 = vlaneseq
        %v492 = vshrl.u32 %v491, 7
        %v493 = vsub.s32 1, %v492
        %v494 = vrot.slane %v483, %v493
        %496 = vbcast.lane.b32.xlu0 %v494, 256
        %v497 = vpop.permute.xlu0 %496
        %v498 = vlaneseq
        %v499 = vshrl.u32 %v498, 7
        %v500 = vsub.s32 2, %v499
        %v501 = vrot.slane %v483, %v500
        %503 = vbcast.lane.b32.xlu0 %v501, 256
        %v504 = vpop.permute.xlu0 %503
        %v505 = vlaneseq
        %v506 = vshrl.u32 %v505, 7
        %v507 = vsub.s32 3, %v506
        %v508 = vrot.slane %v483, %v507
        %510 = vbcast.lane.b32.xlu0 %v508, 256
        %v511 = vpop.permute.xlu0 %510
        %v512 = vlaneseq
        %v513 = vshrl.u32 %v512, 7
        %v514 = vsub.s32 4, %v513
        %v515 = vrot.slane %v483, %v514
        %517 = vbcast.lane.b32.xlu0 %v515, 256
        %v518 = vpop.permute.xlu0 %517
        %v519 = vlaneseq
        %v520 = vshrl.u32 %v519, 7
        %v521 = vsub.s32 5, %v520
        %v522 = vrot.slane %v483, %v521
        %524 = vbcast.lane.b32.xlu0 %v522, 256
        %v525 = vpop.permute.xlu0 %524
        %527 = vrot.lane.b32.xlu0 %v482, 8
        %v528 = vpop.permute.xlu0 %527
        %v530 = vmul.f32 %v476, %v528
        %v531 = vlaneseq
        %v532 = vshrl.u32 %v531, 7
        %v533 = vsub.s32 0, %v532
        %v534 = vrot.slane %v530, %v533
        %s536 = sor.u32 256, 8
        %537 = vbcast.lane.b32.xlu0 %v534, %s536
        %v538 = vpop.permute.xlu0 %537
        %v539 = vlaneseq
        %v540 = vshrl.u32 %v539, 7
        %v541 = vsub.s32 1, %v540
        %v542 = vrot.slane %v530, %v541
        %s544 = sor.u32 256, 8
        %545 = vbcast.lane.b32.xlu0 %v542, %s544
        %v546 = vpop.permute.xlu0 %545
        %v547 = vlaneseq
        %v548 = vshrl.u32 %v547, 7
        %v549 = vsub.s32 2, %v548
        %v550 = vrot.slane %v530, %v549
        %s552 = sor.u32 256, 8
        %553 = vbcast.lane.b32.xlu0 %v550, %s552
        %v554 = vpop.permute.xlu0 %553
        %v555 = vlaneseq
        %v556 = vshrl.u32 %v555, 7
        %v557 = vsub.s32 3, %v556
        %v558 = vrot.slane %v530, %v557
        %s560 = sor.u32 256, 8
        %561 = vbcast.lane.b32.xlu0 %v558, %s560
        %v562 = vpop.permute.xlu0 %561
        %v563 = vlaneseq
        %v564 = vshrl.u32 %v563, 7
        %v565 = vsub.s32 4, %v564
        %v566 = vrot.slane %v530, %v565
        %s568 = sor.u32 256, 8
        %569 = vbcast.lane.b32.xlu0 %v566, %s568
        %v570 = vpop.permute.xlu0 %569
        %v571 = vlaneseq
        %v572 = vshrl.u32 %v571, 7
        %v573 = vsub.s32 5, %v572
        %v574 = vrot.slane %v530, %v573
        %s576 = sor.u32 256, 8
        %577 = vbcast.lane.b32.xlu0 %v574, %s576
        %v578 = vpop.permute.xlu0 %577
        %v579 = vmul.f32 %v490, %v271
        %v580 = vmul.f32 %v497, %v286
        %v581 = vmul.f32 %v504, %v303
        %v582 = vmul.f32 %v511, %v272
        %v583 = vmul.f32 %v518, %v287
        %v584 = vmul.f32 %v525, %v304
        %v585 = vmul.f32 %v538, %v276
        %v586 = vmul.f32 %v546, %v293
        %v587 = vmul.f32 %v554, %v305
        %v588 = vmul.f32 %v562, %v277
        %v589 = vmul.f32 %v570, %v294
        %v590 = vmul.f32 %v578, %v306
        %v591 = vadd.f32 %v579, %v585
        %v592 = vadd.f32 %v580, %v586
        %v593 = vadd.f32 %v581, %v587
        %v594 = vadd.f32 %v582, %v588
        %v595 = vadd.f32 %v583, %v589
        %v596 = vadd.f32 %v584, %v590
        %597 = vst.msk [vmem:[%s255] sm:$0xff] %vm313, %v591
        %598 = vst.msk [vmem:[%s255 + $0x8] sm:$0xff] %vm313, %v592
        %599 = vst.msk [vmem:[%s255 + $0x10] sm:$0xff] %vm313, %v593
        %600 = vst.msk [vmem:[%s255 + $0x18] sm:$0xff] %vm313, %v594
        %601 = vst.msk [vmem:[%s255 + $0x20] sm:$0xff] %vm313, %v595
        %602 = vst.msk [vmem:[%s255 + $0x28] sm:$0xff] %vm313, %v596
        %s603 = sand.u32 %s125, 1
        %s604 = scalar_lea.sflag [#allocation4], %s603
        %s605 = sand.u32 %s125, 1
        %s606 = smul.addr %s605, 48
        %s607 = scalar_lea.vmem [#allocation7], %s606
        // Predicated region
        $region41: #{tpu_custom_call.1} parent=31 // pred_check
          %p608 = pneg %p135
        $region42: #{tpu_custom_call.1} parent=31 // pred_check_branch
          %610 = sbr.rel (%p608) target = $region44
        $region43: #{tpu_custom_call.1} parent=31 // pred_region
          %s611 = smul.u32 2, %s28
          %s613 = ssub.s32 768, 768
          %614 = vsyncadd %s604, %s613
          %s615 = smul.addr %s611, 3
          %s616 = smul.addr %s27, 6
          %s617 = sadd.s32 %s615, %s616
          %s618 = smul.addr %s617, 128
          %s619 = scalar_lea.hbm %s3, %s618
          %s620 = sshll.u32 %s607, 4
          %s621 = int_to_ptr.vmem [resolvable:$true] %s620
          %626 = dma.vmem_to_hbm [thread:$0]  %s621, 768, %s619, %s604, 128, 128, 8
        $region44: #{tpu_custom_call.1} parent=31 // pred_fallthru
          _
      $region32: #{tpu_custom_call.1} parent=5 // pred_fallthru
        _
      %p627 = scmp.le.s32.totalorder 2, %s18
      // Predicated region
      $region45: #{tpu_custom_call.1} parent=5 // pred_check
        %p628 = pneg %p627
      $region46: #{tpu_custom_call.1} parent=5 // pred_check_branch
        %630 = sbr.rel (%p628) target = $region48
      $region47: #{tpu_custom_call.1} parent=5 // pred_region
        %s631 = ssub.s32 %s18, 2
        // Predicated region
        $region49: #{tpu_custom_call.1} parent=47 // pred_check
          %p632 = pneg %p141
        $region50: #{tpu_custom_call.1} parent=47 // pred_check_branch
          %634 = sbr.rel (%p632) target = $region52
        $region51: #{tpu_custom_call.1} parent=47 // pred_region
          %s635 = sand.u32 %s126, 1
          %s636 = scalar_lea.sflag [#allocation4], %s635
          %s637 = sand.u32 %s126, 1
          %s638 = smul.addr %s637, 48
          %s639 = scalar_lea.vmem [#allocation7], %s638
          %640 = dma.done %s636, 768
        $region52: #{tpu_custom_call.1} parent=47 // pred_fallthru
          _
      $region48: #{tpu_custom_call.1} parent=5 // pred_fallthru
        _
    $region6: #{tpu_custom_call.1} parent=1 // loop_footer
      %s22 = sadd.s32 1, %s18
    $region7: #{tpu_custom_call.1} parent=1 // loop_footer_branch
      %17 = sbr.rel target = $region3
    $region8: #{tpu_custom_call.1} parent=1 // loop_exit
      _
    %641 = vsyncpa [#allocation3], 1
    %s642 = scalar_lea.sflag [#allocation3], 1
    %643 = vsyncpa %s642, 1
    %644 = vsyncpa [#allocation6], 1
    %s645 = scalar_lea.sflag [#allocation6], 1
    %646 = vsyncpa %s645, 1
    %647 = vsyncpa [#allocation4], 1
    %s648 = scalar_lea.sflag [#allocation4], 1
    %649 = vsyncpa %s648, 1

</llo_original>
